<compile_context>
chip_gen: v5e
topology: v5e:2x2
jax: 0.10.0
libtpu: 0.0.40
codegen_flags: <defaults>
</compile_context>

<pallas_src>
import functools

import jax
import jax.numpy as jnp
from jax.experimental import pallas as pl
from jax.experimental.pallas import tpu as pltpu

_SUBLANE = 8
_LANE = 128
_MAX_CHUNKS = 16            # static-unroll cap for the in-kernel chunk loop
_MIN_BLOCKS_FOR_SPLIT = 6   # use the 2-way core split only with >=3 blocks/half


def _round_up(v, m):
    return (v + m - 1) // m * m


def _default_vmem_limit():
    """Per-generation scoped-VMEM budget (v7x ~48 MiB, v5e/v6e up to 96 MiB)."""
    try:
        cap = int(pltpu.get_tpu_info().vmem_capacity_bytes)
        if not cap:
            cap = 64 << 20
    except Exception:
        cap = 64 << 20          # conservative (v7x per-core size)
    return min((cap * 3) // 4, 96 << 20)


def _gradient_loss_kernel(x_ref, o_ref, acc_x_ref, acc_y_ref, *,
                          rows, tr, rpc, n_chunks, n_per_core, needs_mask,
                          roll_x, roll_y, compute_dtype):
    # x_ref:     (tr, H, W) input block in VMEM (original dtype)
    # o_ref:     (1, 2) f32 partial sums (sum|dx|, sum|dy|) for this half, SMEM
    # acc_*_ref: f32 VMEM vector accumulators
    c = pl.program_id(0)          # core-half (parallel axis)
    i = pl.program_id(1)          # block step within the half (carried axis)
    b = c * n_per_core + i        # logical block index along the row axis

    @pl.when(i == 0)
    def _():
        acc_x_ref[...] = jnp.zeros_like(acc_x_ref)
        acc_y_ref[...] = jnp.zeros_like(acc_y_ref)

    def add_chunk(ci, masked):
        # Small row chunk -> bounded live range for the f32 intermediates.
        xc = x_ref[pl.ds(ci * rpc, rpc), :, :].astype(compute_dtype)
        h, w = xc.shape[1], xc.shape[2]
        if roll_x:
            # Full-tile rolled diff (XLU rotate; lane-dense, no relayout).
            # The wrap-around column is removed by the wrapper's seam term.
            dx = jnp.abs(xc - pltpu.roll(xc, shift=w - 1, axis=2))
        else:
            dx = jnp.abs(xc[:, :, :-1] - xc[:, :, 1:])
        if roll_y:
            dy = jnp.abs(xc - pltpu.roll(xc, shift=h - 1, axis=1))
        else:
            dy = jnp.abs(xc[:, :-1, :] - xc[:, 1:, :])
        dx = dx.astype(jnp.float32)
        dy = dy.astype(jnp.float32)
        if masked:
            # Rows past the true end (ragged tail / duplicated clamped block)
            # contribute nothing.  Only compiled & taken on the tail path.
            row0 = b * tr + ci * rpc
            local = jax.lax.broadcasted_iota(jnp.int32, (rpc, 1, 1), 0)
            valid = (row0 + local) < rows
            dx = jnp.where(valid, dx, 0.0)
            dy = jnp.where(valid, dy, 0.0)
        # Reduce only over the row axis -> plain vreg adds on the VPU.
        acc_x_ref[...] += jnp.sum(dx, axis=0)
        acc_y_ref[...] += jnp.sum(dy, axis=0)

    def add_block(masked):
        for ci in range(n_chunks):      # static, capped small
            add_chunk(ci, masked)

    if needs_mask:
        is_tail = (b + 1) * tr > rows   # ragged tail or clamped duplicate

        @pl.when(jnp.logical_not(is_tail))
        def _():
            add_block(False)            # common path: select-free

        @pl.when(is_tail)
        def _():
            add_block(True)
    else:
        add_block(False)

    @pl.when(i == pl.num_programs(1) - 1)
    def _():
        o_ref[0, 0] = jnp.sum(acc_x_ref[...])
        o_ref[0, 1] = jnp.sum(acc_y_ref[...])


def gradient_loss(a, *, target_block_bytes=8 << 20, chunk_bytes=512 << 10,
                  vmem_limit_bytes=None):
    """mean(|dx|) + mean(|dy|) over an NCHW image batch (Pallas TPU kernel)."""
    N, C, H, W = a.shape
    assert H >= 2 and W >= 2, "GradientLoss needs H >= 2 and W >= 2"
    R = N * C
    x = a.reshape(R, H, W)          # collapses leading dims only: no HBM copy

    itemsize = jnp.dtype(a.dtype).itemsize
    compute_dtype = jnp.bfloat16 if a.dtype == jnp.bfloat16 else jnp.float32
    sub_pack_in = _SUBLANE * max(1, 4 // itemsize)        # input sublane pack
    sub_pack_cd = _SUBLANE if compute_dtype == jnp.float32 else 16

    if vmem_limit_bytes is None:
        vmem_limit_bytes = _default_vmem_limit()
    usable = (int(vmem_limit_bytes) * 7) // 10            # leave pipeline slack

    # Padded (VMEM) footprint of a single (H, W) slab.
    w_pad = _round_up(W, _LANE)
    in_row = _round_up(H, sub_pack_in) * w_pad * itemsize
    f32_row = _round_up(H, _SUBLANE) * w_pad * 4
    tr_cap_rows = max(1, target_block_bytes // max(1, in_row))

    # Rows per chunk: keep f32 diff intermediates near `chunk_bytes`.
    if R <= _SUBLANE:
        rpc = R
    else:
        rpc = (chunk_bytes // max(1, f32_row)) // _SUBLANE * _SUBLANE
        rpc = int(max(_SUBLANE, min(rpc, 128, (R // _SUBLANE) * _SUBLANE)))
        rpc = min(rpc, max(_SUBLANE, (tr_cap_rows // _SUBLANE) * _SUBLANE))

    # Rows per block (tr = rpc * n_chunks), sized from the padded VMEM budget:
    # 2x double-buffered input + chunk intermediates + accumulators.
    acc_bytes = 2 * f32_row
    inter_bytes = 4 * rpc * f32_row
    per_chunk_in = 2 * rpc * in_row
    avail = usable - acc_bytes - inter_bytes
    n_chunks = 1 if avail <= per_chunk_in else int(avail // per_chunk_in)
    n_chunks = int(max(1, min(n_chunks, _MAX_CHUNKS,
                              max(1, R // max(1, rpc)),
                              max(1, tr_cap_rows // max(1, rpc)))))
    tr = rpc * n_chunks
    assert tr <= R

    n_blocks = pl.cdiv(R, tr)
    n_cores = 2 if n_blocks >= _MIN_BLOCKS_FOR_SPLIT else 1
    n_per_core = pl.cdiv(n_blocks, n_cores)
    needs_mask = (n_cores * n_per_core * tr) != R

    # Roll-based lane-dense diffs only for hardware-aligned shapes; otherwise
    # the slice-based diff (proven lowering) with the narrower accumulator.
    roll_x = (W % _LANE == 0)
    roll_y = (W % _LANE == 0) and (H % sub_pack_cd == 0)
    acc_x_shape = (H, W) if roll_x else (H, W - 1)
    acc_y_shape = (H, W) if roll_y else (H - 1, W)

    def in_index(c, i):
        b = c * n_per_core + i
        # Clamp so logical blocks past the end never DMA out of bounds; their
        # (duplicated) contribution is fully masked in-kernel.
        return (jnp.minimum(b, n_blocks - 1), 0, 0)

    kernel = functools.partial(
        _gradient_loss_kernel, rows=R, tr=tr, rpc=rpc, n_chunks=n_chunks,
        n_per_core=n_per_core, needs_mask=needs_mask,
        roll_x=roll_x, roll_y=roll_y, compute_dtype=compute_dtype)

    partials = pl.pallas_call(
        kernel,
        out_shape=jax.ShapeDtypeStruct((n_cores, 2), jnp.float32),
        grid_spec=pltpu.PrefetchScalarGridSpec(
            num_scalar_prefetch=0,
            grid=(n_cores, n_per_core),
            in_specs=[pl.BlockSpec((tr, H, W), in_index)],
            out_specs=pl.BlockSpec((1, 2), lambda c, i: (c, 0),
                                   memory_space=pltpu.SMEM),
            scratch_shapes=[pltpu.VMEM(acc_x_shape, jnp.float32),
                            pltpu.VMEM(acc_y_shape, jnp.float32)],
        ),
        compiler_params=pltpu.CompilerParams(
            dimension_semantics=("parallel", "arbitrary"),
            vmem_limit_bytes=int(vmem_limit_bytes),
        ),
        cost_estimate=pl.CostEstimate(
            flops=6 * R * H * W,
            transcendentals=0,
            bytes_accessed=R * H * W * itemsize + n_cores * 2 * 4),
    )(x)

    sum_x = jnp.sum(partials[:, 0])
    sum_y = jnp.sum(partials[:, 1])
    if roll_x or roll_y:
        # Remove the wrap-around seam terms of the rolled diffs exactly once.
        # Tiny O(R*(H+W)) work vs the kernel's O(R*H*W) streaming.
        xc = x.astype(compute_dtype)
        if roll_x:
            sum_x = sum_x - jnp.sum(
                jnp.abs(xc[:, :, W - 1] - xc[:, :, 0]).astype(jnp.float32))
        if roll_y:
            sum_y = sum_y - jnp.sum(
                jnp.abs(xc[:, H - 1, :] - xc[:, 0, :]).astype(jnp.float32))

    n_gx = R * H * (W - 1)
    n_gy = R * (H - 1) * W
    return sum_x / n_gx + sum_y / n_gy


if __name__ == "__main__":
    # Primary small NCHW example.
    x = jax.random.uniform(jax.random.PRNGKey(0), (2, 4, 16, 16),
                           dtype=jnp.float32)
    loss = gradient_loss(x)
    jax.block_until_ready(loss)

    gx = jnp.abs(x[:, :, :, :-1] - x[:, :, :, 1:])
    gy = jnp.abs(x[:, :, :-1, :] - x[:, :, 1:, :])
    ref = jnp.mean(gx) + jnp.mean(gy)
    assert jnp.allclose(loss, ref, atol=1e-5, rtol=1e-5), (loss, ref)

    # Second check: small block/chunk budgets force multi-chunk blocks, a
    # ragged tail, the clamped duplicate block and the 2-way core split.
    x2 = jax.random.uniform(jax.random.PRNGKey(1), (97, 1, 16, 16),
                            dtype=jnp.float32)
    loss2 = gradient_loss(x2, target_block_bytes=128 * 1024,
                          chunk_bytes=32 * 1024)
    jax.block_until_ready(loss2)

    gx2 = jnp.abs(x2[:, :, :, :-1] - x2[:, :, :, 1:])
    gy2 = jnp.abs(x2[:, :, :-1, :] - x2[:, :, 1:, :])
    ref2 = jnp.mean(gx2) + jnp.mean(gy2)
    assert jnp.allclose(loss2, ref2, atol=1e-5, rtol=1e-5), (loss2, ref2)

    print("KERNEL_OK")
</pallas_src>

<mosaic_0001>
module attributes {stable_mosaic.version = 11 : i64} {
  func.func @_gradient_loss_kernel(%arg0: i32, %arg1: i32, %arg2: memref<8x16x16xf32, #tpu.memory_space<vmem>>, %arg3: memref<1x2xf32, #tpu.memory_space<smem>>, %arg4: memref<16x15xf32, #tpu.memory_space<vmem>>, %arg5: memref<15x16xf32, #tpu.memory_space<vmem>>) attributes {dimension_semantics = [#tpu.dimension_semantics<parallel>, #tpu.dimension_semantics<arbitrary>], iteration_bounds = array<i64: 1, 1>, scalar_prefetch = 0 : i64, scratch_operands = 2 : i64, tpu.core_type = #tpu.core_type<tc>, window_params = [{transform_indices = @transform_0, window_bounds = array<i64: 8, 16, 16>}, {transform_indices = @transform_1, window_bounds = array<i64: 1, 2>}]} {
    %c0_i32 = arith.constant 0 : i32
    %0 = arith.cmpi eq, %arg1, %c0_i32 : i32
    %1 = arith.extui %0 : i1 to i32
    %c0_i32_0 = arith.constant 0 : i32
    %2 = arith.cmpi ne, %1, %c0_i32_0 : i32
    scf.if %2 {
      %cst_14 = arith.constant 0.000000e+00 : f32
      %23 = vector.broadcast %cst_14 : f32 to vector<16x15xf32>
      %c0_15 = arith.constant 0 : index
      %c0_16 = arith.constant 0 : index
      %24 = vector.load %arg4[%c0_15, %c0_16] : memref<16x15xf32, #tpu.memory_space<vmem>>, vector<16x15xf32>
      tpu.vector_store %arg4[%c0_15, %c0_16], %23 {strides = array<i32>} : memref<16x15xf32, #tpu.memory_space<vmem>>, vector<16x15xf32>,
      %cst_17 = arith.constant 0.000000e+00 : f32
      %25 = vector.broadcast %cst_17 : f32 to vector<15x16xf32>
      %c0_18 = arith.constant 0 : index
      %c0_19 = arith.constant 0 : index
      %26 = vector.load %arg5[%c0_18, %c0_19] : memref<15x16xf32, #tpu.memory_space<vmem>>, vector<15x16xf32>
      tpu.vector_store %arg5[%c0_18, %c0_19], %25 {strides = array<i32>} : memref<15x16xf32, #tpu.memory_space<vmem>>, vector<15x16xf32>,
    } else {
    }
    %c0 = arith.constant 0 : index
    %c0_1 = arith.constant 0 : index
    %c0_2 = arith.constant 0 : index
    %3 = vector.load %arg2[%c0, %c0_1, %c0_2] : memref<8x16x16xf32, #tpu.memory_space<vmem>>, vector<8x16x16xf32>
    %4 = vector.extract_strided_slice %3 {offsets = [0, 0, 0], sizes = [8, 16, 15], strides = [1, 1, 1]} : vector<8x16x16xf32> to vector<8x16x15xf32>
    %5 = vector.extract_strided_slice %3 {offsets = [0, 0, 1], sizes = [8, 16, 15], strides = [1, 1, 1]} : vector<8x16x16xf32> to vector<8x16x15xf32>
    %6 = arith.subf %4, %5 : vector<8x16x15xf32>
    %7 = math.absf %6 : vector<8x16x15xf32>
    %8 = vector.extract_strided_slice %3 {offsets = [0, 0, 0], sizes = [8, 15, 16], strides = [1, 1, 1]} : vector<8x16x16xf32> to vector<8x15x16xf32>
    %9 = vector.extract_strided_slice %3 {offsets = [0, 1, 0], sizes = [8, 15, 16], strides = [1, 1, 1]} : vector<8x16x16xf32> to vector<8x15x16xf32>
    %10 = arith.subf %8, %9 : vector<8x15x16xf32>
    %11 = math.absf %10 : vector<8x15x16xf32>
    %c0_3 = arith.constant 0 : index
    %c0_4 = arith.constant 0 : index
    %12 = vector.load %arg4[%c0_3, %c0_4] : memref<16x15xf32, #tpu.memory_space<vmem>>, vector<16x15xf32>
    %cst = arith.constant dense<0.000000e+00> : vector<16x15xf32>
    %13 = vector.multi_reduction <add>, %7, %cst [0] : vector<8x16x15xf32> to vector<16x15xf32>
    %14 = arith.addf %12, %13 : vector<16x15xf32>
    %c0_5 = arith.constant 0 : index
    %c0_6 = arith.constant 0 : index
    %15 = vector.load %arg4[%c0_5, %c0_6] : memref<16x15xf32, #tpu.memory_space<vmem>>, vector<16x15xf32>
    tpu.vector_store %arg4[%c0_5, %c0_6], %14 {strides = array<i32>} : memref<16x15xf32, #tpu.memory_space<vmem>>, vector<16x15xf32>,
    %c0_7 = arith.constant 0 : index
    %c0_8 = arith.constant 0 : index
    %16 = vector.load %arg5[%c0_7, %c0_8] : memref<15x16xf32, #tpu.memory_space<vmem>>, vector<15x16xf32>
    %cst_9 = arith.constant dense<0.000000e+00> : vector<15x16xf32>
    %17 = vector.multi_reduction <add>, %11, %cst_9 [0] : vector<8x15x16xf32> to vector<15x16xf32>
    %18 = arith.addf %16, %17 : vector<15x16xf32>
    %c0_10 = arith.constant 0 : index
    %c0_11 = arith.constant 0 : index
    %19 = vector.load %arg5[%c0_10, %c0_11] : memref<15x16xf32, #tpu.memory_space<vmem>>, vector<15x16xf32>
    tpu.vector_store %arg5[%c0_10, %c0_11], %18 {strides = array<i32>} : memref<15x16xf32, #tpu.memory_space<vmem>>, vector<15x16xf32>,
    %c0_i32_12 = arith.constant 0 : i32
    %20 = arith.cmpi eq, %arg1, %c0_i32_12 : i32
    %21 = arith.extui %20 : i1 to i32
    %c0_i32_13 = arith.constant 0 : i32
    %22 = arith.cmpi ne, %21, %c0_i32_13 : i32
    scf.if %22 {
      %c0_14 = arith.constant 0 : index
      %c0_15 = arith.constant 0 : index
      %23 = vector.load %arg4[%c0_14, %c0_15] : memref<16x15xf32, #tpu.memory_space<vmem>>, vector<16x15xf32>
      %24 = vector.shape_cast %23 : vector<16x15xf32> to vector<1x16x15xf32>
      %cst_16 = arith.constant dense<0.000000e+00> : vector<1xf32>
      %25 = vector.multi_reduction <add>, %24, %cst_16 [1, 2] : vector<1x16x15xf32> to vector<1xf32>
      %26 = vector.shape_cast %25 : vector<1xf32> to vector<1x1x1xf32>
      %27 = vector.extract %26[0, 0, 0] : f32 from vector<1x1x1xf32>
      %c0_17 = arith.constant 0 : index
      %c0_18 = arith.constant 0 : index
      %28 = memref.load %arg3[%c0_17, %c0_18] : memref<1x2xf32, #tpu.memory_space<smem>>
      memref.store %27, %arg3[%c0_17, %c0_18] : memref<1x2xf32, #tpu.memory_space<smem>>
      %c0_19 = arith.constant 0 : index
      %c0_20 = arith.constant 0 : index
      %29 = vector.load %arg5[%c0_19, %c0_20] : memref<15x16xf32, #tpu.memory_space<vmem>>, vector<15x16xf32>
      %30 = vector.shape_cast %29 : vector<15x16xf32> to vector<1x15x16xf32>
      %cst_21 = arith.constant dense<0.000000e+00> : vector<1xf32>
      %31 = vector.multi_reduction <add>, %30, %cst_21 [1, 2] : vector<1x15x16xf32> to vector<1xf32>
      %32 = vector.shape_cast %31 : vector<1xf32> to vector<1x1x1xf32>
      %33 = vector.extract %32[0, 0, 0] : f32 from vector<1x1x1xf32>
      %c0_22 = arith.constant 0 : index
      %c1 = arith.constant 1 : index
      %34 = memref.load %arg3[%c0_22, %c1] : memref<1x2xf32, #tpu.memory_space<smem>>
      memref.store %33, %arg3[%c0_22, %c1] : memref<1x2xf32, #tpu.memory_space<smem>>
    } else {
    }
    return
  }
  func.func @transform_0(%arg0: i32, %arg1: i32) -> (i32, i32, i32) {
    %c1_i32 = arith.constant 1 : i32
    %0 = arith.muli %arg0, %c1_i32 : i32
    %1 = arith.addi %0, %arg1 : i32
    %c0_i32 = arith.constant 0 : i32
    %2 = arith.minsi %1, %c0_i32 : i32
    %c0_i32_0 = arith.constant 0 : i32
    %c0_i32_1 = arith.constant 0 : i32
    %c0_i32_2 = arith.constant 0 : i32
    return %2, %c0_i32_0, %c0_i32_1 : i32, i32, i32
  }
  func.func @transform_1(%arg0: i32, %arg1: i32) -> (i32, i32) {
    %c0_i32 = arith.constant 0 : i32
    %c0_i32_0 = arith.constant 0 : i32
    return %arg0, %c0_i32 : i32, i32
  }
}

</mosaic_0001>

<llo_original>
// kernel: tpu_custom_call.1
$region0: #{tpu_custom_call.1}
  #allocation0 [shape = 'u32[]', space=smem, size = 0x4, offset = 0x4, fixed_abs, tag = 'smem constant byte address 0x4 - core index']
  #allocation1 [shape = 'u32[72,128]{1,0:T(1,128)}', space=vmem, size = 0x9000, scoped, tag = 'internal scratch']
  #allocation2 [shape = 'f32[16,15]{1,0:T(8,128)}', space=vmem, size = 0x2000, scoped, tag = 'scratch operand']
  #allocation3 [shape = 'f32[15,16]{1,0:T(8,128)}', space=vmem, size = 0x2000, scoped, tag = 'scratch operand']
  %s0 = inlined_call_operand.hbm [shape: f32[8,16,16], index: 0, kind: input, shape index: {}]
  %s1 = inlined_call_operand.hbm [shape: f32[1,2], index: 1, kind: output, shape index: {}]
  %s2 = sld [smem:[#allocation0]]
  $region26: #{tpu_custom_call.1} parent=0
    _
  %s4 = ssub.s32 1, %s2
  %s5 = scalar_select 0, %s4, %s2
  $region1: #{tpu_custom_call.1} parent=0
    #allocation4 [shape = 'u8[65536]{0}', space=vmem, size = 0x10000, scoped, tag = 'input window, operand 0, single buffered']
    #allocation5 [shape = 's32[1]{0}', space=sflag, size = 0x4, scoped, tag = 'scoped memory for tpu_custom_call.1']
    #allocation6 [shape = 's32[1]{0}', space=sflag, size = 0x4, scoped, tag = 'scoped memory for tpu_custom_call.1']
    #allocation7 [shape = 'u8[512]{0}', space=smem, size = 0x200, scoped, tag = 'output window, operand 0, single buffered']
    %6 = vsyncpa [#allocation5], 0
    %7 = vsyncpa [#allocation6], 0
    // Predicated region
    $region2: #{tpu_custom_call.1} parent=1 // pred_check
      _
    $region3: #{tpu_custom_call.1} parent=1 // pred_check_branch
      %9 = sbr.rel (0) target = $region5
    $region4: #{tpu_custom_call.1} parent=1 // pred_region
      %s10 = sadd.s32 0, 0
      %p11 = scmp.lt.s32.totalorder %s10, 0
      %s12 = scalar_select %p11, %s10, 0
      %s13 = smul.u32 8, %s12
      %15 = vsyncadd [#allocation5], 0
      %s16 = smul.addr %s13, 2
      %s17 = smul.addr %s16, 8
      %s18 = scalar_lea.hbm %s0, %s17
      %s19 = sshll.u32 %s18, 4
      %s20 = int_to_ptr.hbm [resolvable:$true] %s19
      %s21 = sshll.u32 [#allocation4], 4
      %s22 = int_to_ptr.vmem [resolvable:$true] %s21
      %27 = dma.hbm_to_vmem [thread:$0]  %s20, 2048, %s22, [#allocation5], 128, 128, 8
    $region5: #{tpu_custom_call.1} parent=1 // pred_fallthru
      _
    // Predicated region
    $region6: #{tpu_custom_call.1} parent=1 // pred_check
      _
    $region7: #{tpu_custom_call.1} parent=1 // pred_check_branch
      %29 = sbr.rel (0) target = $region9
    $region8: #{tpu_custom_call.1} parent=1 // pred_region
      %31 = dma.done [#allocation5], 2048
    $region9: #{tpu_custom_call.1} parent=1 // pred_fallthru
      _
    %s32 = sadd.s32 0, 0
    %p33 = scmp.lt.s32.totalorder %s32, 0
    %s34 = scalar_select %p33, %s32, 0
    %s35 = smul.u32 8, %s34
    %p36 = scmp.eq.s32.totalorder 0, 0
    // Predicated region
    $region10: #{tpu_custom_call.1} parent=1 // pred_check
      %p37 = pneg %p36
    $region11: #{tpu_custom_call.1} parent=1 // pred_check_branch
      %39 = sbr.rel (%p37) target = $region13
    $region12: #{tpu_custom_call.1} parent=1 // pred_region
      %vm40 = vcmask 121856
      %41 = vst.msk [vmem:[#allocation2] sm:$0xff] %vm40, 0.0
      %42 = vst.msk [vmem:[#allocation2 + $0x8] sm:$0xff] %vm40, 0.0
      %vm43 = vcmask 130048
      %44 = vst.msk [vmem:[#allocation3] sm:$0xff] %vm43, 0.0
      %vm45 = vcmask 129024
      %46 = vst.msk [vmem:[#allocation3 + $0x8] sm:$0x7f] %vm45, 0.0
    $region13: #{tpu_custom_call.1} parent=1 // pred_fallthru
      _
    %v47 = vld [vmem:[#allocation4] sm:$0xff]
    %v48 = vld [vmem:[#allocation4 + $0x8] sm:$0xff]
    %v49 = vld [vmem:[#allocation4 + $0x10] sm:$0xff]
    %v50 = vld [vmem:[#allocation4 + $0x18] sm:$0xff]
    %v51 = vld [vmem:[#allocation4 + $0x20] sm:$0xff]
    %v52 = vld [vmem:[#allocation4 + $0x28] sm:$0xff]
    %v53 = vld [vmem:[#allocation4 + $0x30] sm:$0xff]
    %v54 = vld [vmem:[#allocation4 + $0x38] sm:$0xff]
    %v55 = vld [vmem:[#allocation4 + $0x40] sm:$0xff]
    %v56 = vld [vmem:[#allocation4 + $0x48] sm:$0xff]
    %v57 = vld [vmem:[#allocation4 + $0x50] sm:$0xff]
    %v58 = vld [vmem:[#allocation4 + $0x58] sm:$0xff]
    %v59 = vld [vmem:[#allocation4 + $0x60] sm:$0xff]
    %v60 = vld [vmem:[#allocation4 + $0x68] sm:$0xff]
    %v61 = vld [vmem:[#allocation4 + $0x70] sm:$0xff]
    %v62 = vld [vmem:[#allocation4 + $0x78] sm:$0xff]
    %79 = vrot.lane.b32.xlu0 %v47, 127
    %v80 = vpop.permute.xlu0 %79
    %81 = vrot.lane.b32.xlu0 %v48, 127
    %v82 = vpop.permute.xlu0 %81
    %83 = vrot.lane.b32.xlu0 %v49, 127
    %v84 = vpop.permute.xlu0 %83
    %85 = vrot.lane.b32.xlu0 %v50, 127
    %v86 = vpop.permute.xlu0 %85
    %87 = vrot.lane.b32.xlu0 %v51, 127
    %v88 = vpop.permute.xlu0 %87
    %89 = vrot.lane.b32.xlu0 %v52, 127
    %v90 = vpop.permute.xlu0 %89
    %91 = vrot.lane.b32.xlu0 %v53, 127
    %v92 = vpop.permute.xlu0 %91
    %93 = vrot.lane.b32.xlu0 %v54, 127
    %v94 = vpop.permute.xlu0 %93
    %95 = vrot.lane.b32.xlu0 %v55, 127
    %v96 = vpop.permute.xlu0 %95
    %97 = vrot.lane.b32.xlu0 %v56, 127
    %v98 = vpop.permute.xlu0 %97
    %99 = vrot.lane.b32.xlu0 %v57, 127
    %v100 = vpop.permute.xlu0 %99
    %101 = vrot.lane.b32.xlu0 %v58, 127
    %v102 = vpop.permute.xlu0 %101
    %103 = vrot.lane.b32.xlu0 %v59, 127
    %v104 = vpop.permute.xlu0 %103
    %105 = vrot.lane.b32.xlu0 %v60, 127
    %v106 = vpop.permute.xlu0 %105
    %107 = vrot.lane.b32.xlu0 %v61, 127
    %v108 = vpop.permute.xlu0 %107
    %109 = vrot.lane.b32.xlu0 %v62, 127
    %v110 = vpop.permute.xlu0 %109
    %v127 = vsub.f32 %v47, %v80
    %v128 = vsub.f32 %v48, %v82
    %v129 = vsub.f32 %v49, %v84
    %v130 = vsub.f32 %v50, %v86
    %v131 = vsub.f32 %v51, %v88
    %v132 = vsub.f32 %v52, %v90
    %v133 = vsub.f32 %v53, %v92
    %v134 = vsub.f32 %v54, %v94
    %v135 = vsub.f32 %v55, %v96
    %v136 = vsub.f32 %v56, %v98
    %v137 = vsub.f32 %v57, %v100
    %v138 = vsub.f32 %v58, %v102
    %v139 = vsub.f32 %v59, %v104
    %v140 = vsub.f32 %v60, %v106
    %v141 = vsub.f32 %v61, %v108
    %v142 = vsub.f32 %v62, %v110
    %v143 = vand.u32 2147483647, %v127
    %v144 = vand.u32 2147483647, %v128
    %v145 = vand.u32 2147483647, %v129
    %v146 = vand.u32 2147483647, %v130
    %v147 = vand.u32 2147483647, %v131
    %v148 = vand.u32 2147483647, %v132
    %v149 = vand.u32 2147483647, %v133
    %v150 = vand.u32 2147483647, %v134
    %v151 = vand.u32 2147483647, %v135
    %v152 = vand.u32 2147483647, %v136
    %v153 = vand.u32 2147483647, %v137
    %v154 = vand.u32 2147483647, %v138
    %v155 = vand.u32 2147483647, %v139
    %v156 = vand.u32 2147483647, %v140
    %v157 = vand.u32 2147483647, %v141
    %v158 = vand.u32 2147483647, %v142
    %vm159 = vcmask 1046528
    %v160 = vrot.slane %v47, 1
    %v161 = vrot.slane %v48, 1
    %v162 = vsel %vm159, %v160, %v161
    %v163 = vrot.slane %v49, 1
    %v164 = vrot.slane %v50, 1
    %v165 = vsel %vm159, %v163, %v164
    %v166 = vrot.slane %v51, 1
    %v167 = vrot.slane %v52, 1
    %v168 = vsel %vm159, %v166, %v167
    %v169 = vrot.slane %v53, 1
    %v170 = vrot.slane %v54, 1
    %v171 = vsel %vm159, %v169, %v170
    %v172 = vrot.slane %v55, 1
    %v173 = vrot.slane %v56, 1
    %v174 = vsel %vm159, %v172, %v173
    %v175 = vrot.slane %v57, 1
    %v176 = vrot.slane %v58, 1
    %v177 = vsel %vm159, %v175, %v176
    %v178 = vrot.slane %v59, 1
    %v179 = vrot.slane %v60, 1
    %v180 = vsel %vm159, %v178, %v179
    %v181 = vrot.slane %v61, 1
    %v182 = vrot.slane %v62, 1
    %v183 = vsel %vm159, %v181, %v182
    %v200 = vsub.f32 %v47, %v162
    %v201 = vsub.f32 %v48, %v161
    %v202 = vsub.f32 %v49, %v165
    %v203 = vsub.f32 %v50, %v164
    %v204 = vsub.f32 %v51, %v168
    %v205 = vsub.f32 %v52, %v167
    %v206 = vsub.f32 %v53, %v171
    %v207 = vsub.f32 %v54, %v170
    %v208 = vsub.f32 %v55, %v174
    %v209 = vsub.f32 %v56, %v173
    %v210 = vsub.f32 %v57, %v177
    %v211 = vsub.f32 %v58, %v176
    %v212 = vsub.f32 %v59, %v180
    %v213 = vsub.f32 %v60, %v179
    %v214 = vsub.f32 %v61, %v183
    %v215 = vsub.f32 %v62, %v182
    %v216 = vand.u32 2147483647, %v200
    %v217 = vand.u32 2147483647, %v201
    %v218 = vand.u32 2147483647, %v202
    %v219 = vand.u32 2147483647, %v203
    %v220 = vand.u32 2147483647, %v204
    %v221 = vand.u32 2147483647, %v205
    %v222 = vand.u32 2147483647, %v206
    %v223 = vand.u32 2147483647, %v207
    %v224 = vand.u32 2147483647, %v208
    %v225 = vand.u32 2147483647, %v209
    %v226 = vand.u32 2147483647, %v210
    %v227 = vand.u32 2147483647, %v211
    %v228 = vand.u32 2147483647, %v212
    %v229 = vand.u32 2147483647, %v213
    %v230 = vand.u32 2147483647, %v214
    %v231 = vand.u32 2147483647, %v215
    %v232 = vld [vmem:[#allocation2] sm:$0xff]
    %v233 = vld [vmem:[#allocation2 + $0x8] sm:$0xff]
    %vm234 = vcmask 121856
    %v235 = vsel %vm234, %v143, 0.0
    %v236 = vsel %vm234, %v145, 0.0
    %v237 = vadd.f32 %v235, %v236
    %v238 = vsel %vm234, %v147, 0.0
    %v239 = vadd.f32 %v237, %v238
    %v240 = vsel %vm234, %v149, 0.0
    %v241 = vadd.f32 %v239, %v240
    %v242 = vsel %vm234, %v151, 0.0
    %v243 = vadd.f32 %v241, %v242
    %v244 = vsel %vm234, %v153, 0.0
    %v245 = vadd.f32 %v243, %v244
    %v246 = vsel %vm234, %v155, 0.0
    %v247 = vadd.f32 %v245, %v246
    %v248 = vsel %vm234, %v157, 0.0
    %v249 = vadd.f32 %v247, %v248
    %v250 = vsel %vm234, %v144, 0.0
    %v251 = vsel %vm234, %v146, 0.0
    %v252 = vadd.f32 %v250, %v251
    %v253 = vsel %vm234, %v148, 0.0
    %v254 = vadd.f32 %v252, %v253
    %v255 = vsel %vm234, %v150, 0.0
    %v256 = vadd.f32 %v254, %v255
    %v257 = vsel %vm234, %v152, 0.0
    %v258 = vadd.f32 %v256, %v257
    %v259 = vsel %vm234, %v154, 0.0
    %v260 = vadd.f32 %v258, %v259
    %v261 = vsel %vm234, %v156, 0.0
    %v262 = vadd.f32 %v260, %v261
    %v263 = vsel %vm234, %v158, 0.0
    %v264 = vadd.f32 %v262, %v263
    %v265 = vadd.f32 %v232, %v249
    %v266 = vadd.f32 %v233, %v264
    %267 = vst.msk [vmem:[#allocation2] sm:$0xff] %vm234, %v265
    %268 = vst.msk [vmem:[#allocation2 + $0x8] sm:$0xff] %vm234, %v266
    %v269 = vld [vmem:[#allocation3] sm:$0xff]
    %v270 = vld [vmem:[#allocation3 + $0x8] sm:$0x7f]
    %vm271 = vcmask 130048
    %v272 = vsel %vm271, %v216, 0.0
    %v273 = vsel %vm271, %v218, 0.0
    %v274 = vadd.f32 %v272, %v273
    %v275 = vsel %vm271, %v220, 0.0
    %v276 = vadd.f32 %v274, %v275
    %v277 = vsel %vm271, %v222, 0.0
    %v278 = vadd.f32 %v276, %v277
    %v279 = vsel %vm271, %v224, 0.0
    %v280 = vadd.f32 %v278, %v279
    %v281 = vsel %vm271, %v226, 0.0
    %v282 = vadd.f32 %v280, %v281
    %v283 = vsel %vm271, %v228, 0.0
    %v284 = vadd.f32 %v282, %v283
    %v285 = vsel %vm271, %v230, 0.0
    %v286 = vadd.f32 %v284, %v285
    %vm287 = vcmask 129024
    %v288 = vsel %vm287, %v217, 0.0
    %v289 = vsel %vm287, %v219, 0.0
    %v290 = vadd.f32 %v288, %v289
    %v291 = vsel %vm287, %v221, 0.0
    %v292 = vadd.f32 %v290, %v291
    %v293 = vsel %vm287, %v223, 0.0
    %v294 = vadd.f32 %v292, %v293
    %v295 = vsel %vm287, %v225, 0.0
    %v296 = vadd.f32 %v294, %v295
    %v297 = vsel %vm287, %v227, 0.0
    %v298 = vadd.f32 %v296, %v297
    %v299 = vsel %vm287, %v229, 0.0
    %v300 = vadd.f32 %v298, %v299
    %v301 = vsel %vm287, %v231, 0.0
    %v302 = vadd.f32 %v300, %v301
    %v303 = vadd.f32 %v269, %v286
    %v304 = vadd.f32 %v270, %v302
    %305 = vst.msk [vmem:[#allocation3] sm:$0xff] %vm271, %v303
    %306 = vst.msk [vmem:[#allocation3 + $0x8] sm:$0x7f] %vm287, %v304
    // Predicated region
    $region14: #{tpu_custom_call.1} parent=1 // pred_check
      %p307 = pneg %p36
    $region15: #{tpu_custom_call.1} parent=1 // pred_check_branch
      %309 = sbr.rel (%p307) target = $region17
    $region16: #{tpu_custom_call.1} parent=1 // pred_region
      %v310 = vld [vmem:[#allocation2] sm:$0xff]
      %v311 = vld [vmem:[#allocation2 + $0x8] sm:$0xff]
      %v312 = vsel %vm234, %v310, 0.0
      %v313 = vsel %vm234, %v311, 0.0
      %v314 = vadd.f32 %v312, %v313
      %315 = vadd.xlane.f32.xlu0 %v314
      %v316 = vpop.xlane.xlu0 %315
      %v317 = vrot.slane %v316, 4
      %v318 = vadd.f32 %v316, %v317
      %v319 = vrot.slane %v318, 2
      %v320 = vadd.f32 %v318, %v319
      %v321 = vrot.slane %v320, 1
      %v322 = vadd.f32 %v320, %v321
      %s323 = vtos %v322
      %s324 = scalar_lea.smem [#allocation7], 0
      %325 = sst [smem:[%s324]] %s323
      %v326 = vld [vmem:[#allocation3] sm:$0xff]
      %v327 = vld [vmem:[#allocation3 + $0x8] sm:$0x7f]
      %v328 = vsel %vm271, %v326, 0.0
      %v329 = vsel %vm287, %v327, 0.0
      %v330 = vadd.f32 %v328, %v329
      %331 = vadd.xlane.f32.xlu0 %v330
      %v332 = vpop.xlane.xlu0 %331
      %v333 = vrot.slane %v332, 4
      %v334 = vadd.f32 %v332, %v333
      %v335 = vrot.slane %v334, 2
      %v336 = vadd.f32 %v334, %v335
      %v337 = vrot.slane %v336, 1
      %v338 = vadd.f32 %v336, %v337
      %s339 = vtos %v338
      %s340 = scalar_lea.smem [#allocation7], 1
      %341 = sst [smem:[%s340]] %s339
    $region17: #{tpu_custom_call.1} parent=1 // pred_fallthru
      _
    // Predicated region
    $region18: #{tpu_custom_call.1} parent=1 // pred_check
      _
    $region19: #{tpu_custom_call.1} parent=1 // pred_check_branch
      %343 = sbr.rel (0) target = $region21
    $region20: #{tpu_custom_call.1} parent=1 // pred_region
      %345 = vsyncadd [#allocation6], 0
      %s347 = sshll.u32 %s1, 4
      %s348 = int_to_ptr.hbm [resolvable:$true] %s347
      %350 = dma.smem_to_hbm [#allocation7], 16, %s348, [#allocation6]
    $region21: #{tpu_custom_call.1} parent=1 // pred_fallthru
      _
    // Predicated region
    $region22: #{tpu_custom_call.1} parent=1 // pred_check
      _
    $region23: #{tpu_custom_call.1} parent=1 // pred_check_branch
      %352 = sbr.rel (0) target = $region25
    $region24: #{tpu_custom_call.1} parent=1 // pred_region
      %354 = dma.done [#allocation6], 16
    $region25: #{tpu_custom_call.1} parent=1 // pred_fallthru
      _
    %355 = sfence
    %356 = vsyncpa [#allocation5], 1
    %357 = vsyncpa [#allocation6], 1

</llo_original>
